<compile_context>
chip_gen: v5e
topology: v5e:2x2
jax: 0.10.0
libtpu: 0.0.40
codegen_flags: <defaults>
</compile_context>

<pallas_src>
import math
import functools

import numpy as np
import jax
import jax.numpy as jnp
from jax.experimental import pallas as pl
from jax.experimental.pallas import tpu as pltpu


def _gauss_1d(kernlen=5, nsig=3):
    """1D factor k1 such that gkern(kernlen) == outer(k1, k1) exactly.

    gkern builds kernel_raw = sqrt(outer(kern1d, kern1d)); since kern1d >= 0
    this equals outer(s, s) with s = sqrt(kern1d), and normalizing by
    kernel_raw.sum() = (s.sum())**2 gives outer(s/s.sum(), s/s.sum()).
    (scipy.stats.norm.cdf reproduced with math.erf, no scipy dependency.)
    """
    interval = (2 * nsig + 1.0) / kernlen
    x = np.linspace(-nsig - interval / 2.0, nsig + interval / 2.0, kernlen + 1)
    cdf = np.array([0.5 * (1.0 + math.erf(v / math.sqrt(2.0))) for v in x])
    kern1d = np.diff(cdf)
    s = np.sqrt(kern1d)
    return s / s.sum()


def _banded_blur_matrix(n, k1):
    """B (n, n) with (B @ X)[i, :] = sum_d k1[d] * X[clamp(i+d-2, 0, n-1), :].

    5-tap filter with replicate padding folded into the boundary rows, so no
    padded copy of pred is ever materialized.
    """
    taps = len(k1)
    r = taps // 2
    b = np.zeros((n, n), dtype=np.float64)
    for i in range(n):
        for d in range(taps):
            j = min(max(i + d - r, 0), n - 1)
            b[i, j] += k1[d]
    return b.astype(np.float32)


def _softedge_kernel(bh_ref, bw_ref, pred_ref, target_ref, loss_ref,
                     acc_t_ref, acc_bce_ref, acc_tbce_ref, *, mode, denom):
    # bh_ref:     (H, H) f32  banded H-pass matrix (resident across the grid)
    # bw_ref:     (W, W) f32  banded W-pass matrix (resident across the grid)
    # pred_ref:   (tb, H, W) f32  current batch tile
    # target_ref: (tb, H, W) f32  current batch tile
    # loss_ref:   (1, 1) f32      scalar output (written on the last step)
    # acc_*_ref:  (H, W) f32 VMEM scratch, elementwise running partial sums
    step = pl.program_id(0)

    @pl.when(step == 0)
    def _init():
        acc_t_ref[...] = jnp.zeros_like(acc_t_ref)
        acc_bce_ref[...] = jnp.zeros_like(acc_bce_ref)
        acc_tbce_ref[...] = jnp.zeros_like(acc_tbce_ref)

    nb = pred_ref.shape[0]  # static batch tile, unrolled
    t_part = None
    bce_part = None
    tbce_part = None
    for i in range(nb):
        x = pred_ref[i].astype(jnp.float32)      # (H, W)
        t = target_ref[i].astype(jnp.float32)    # (H, W)

        # --- separable 5x5 Gaussian blur on the MXU: B_h @ (X @ B_w) ---
        y = jnp.dot(x, bw_ref[...], preferred_element_type=jnp.float32)
        blur = jnp.dot(bh_ref[...], y, preferred_element_type=jnp.float32)

        # --- binary cross entropy (elementwise) ---
        if mode == 'normal':
            # Convex combination of [0,1] values; clip guards against MXU
            # rounding pushing it infinitesimally outside [0,1] (log -> NaN).
            p = jnp.clip(blur, 0.0, 1.0)
            # PyTorch F.binary_cross_entropy clamps the log terms at -100.
            log_p = jnp.maximum(jnp.log(p), -100.0)
            log_1mp = jnp.maximum(jnp.log(1.0 - p), -100.0)
            bce = -(t * log_p + (1.0 - t) * log_1mp)
        else:
            # binary_cross_entropy_with_logits (numerically stable form).
            bce = (jnp.maximum(blur, 0.0) - blur * t
                   + jnp.log1p(jnp.exp(-jnp.abs(blur))))

        tbce = t * bce
        t_part = t if t_part is None else t_part + t
        bce_part = bce if bce_part is None else bce_part + bce
        tbce_part = tbce if tbce_part is None else tbce_part + tbce

    # Elementwise VPU accumulation; the expensive cross-lane reduction is
    # deferred to the single finalize step below.
    acc_t_ref[...] += t_part
    acc_bce_ref[...] += bce_part
    acc_tbce_ref[...] += tbce_part

    @pl.when(step == pl.num_programs(0) - 1)
    def _finalize():
        sum_t = jnp.sum(acc_t_ref[...])
        sum_bce = jnp.sum(acc_bce_ref[...])
        sum_tbce = jnp.sum(acc_tbce_ref[...])
        # beta = 1 - mean(target); weights = 1 - beta + (2*beta - 1) * target
        # mean(weights * bce) = ((1-beta)*sum_bce + (2beta-1)*sum_tbce)/numel
        beta = 1.0 - sum_t / denom
        loss = ((1.0 - beta) * sum_bce
                + (2.0 * beta - 1.0) * sum_tbce) / denom
        loss_ref[...] = jnp.broadcast_to(loss, (1, 1))


def soft_edge_loss(pred, target, mode='normal'):
    """pred, target: (N, 1, H, W); returns scalar loss (matches SoftEdgeLoss)."""
    pred = pred.astype(jnp.float32)
    target = target.astype(jnp.float32)
    N, C, H, W = pred.shape
    assert C == 1, "SoftEdgeLoss uses a (1,1,5,5) conv kernel, so C must be 1"

    # Squeeze the C=1 dim: lane-dense (N, H, W) layout, no NCHW channel axis.
    pred2 = pred.reshape(N, H, W)
    target2 = target.reshape(N, H, W)

    # Banded blur matrices (replicate padding folded into boundary rows).
    k1 = _gauss_1d(kernlen=5, nsig=3)
    bh = jnp.asarray(_banded_blur_matrix(H, k1))      # left-multiply  (H, H)
    bw = jnp.asarray(_banded_blur_matrix(W, k1).T)    # right-multiply (W, W)

    denom = float(N * C * H * W)

    # Batch tile: largest divisor of N (<= 8, and under a ~4 MiB per-buffer
    # VMEM budget with double-buffering) to amortize per-grid-step overhead.
    bytes_per_img = H * W * 4 * 2  # pred + target, f32
    cap = max(1, min(8, (4 * 1024 * 1024) // max(bytes_per_img, 1)))
    tb = 1
    for d in range(1, min(N, cap) + 1):
        if N % d == 0:
            tb = d
    grid_n = N // tb

    kernel_fn = functools.partial(_softedge_kernel, mode=mode, denom=denom)

    out = pl.pallas_call(
        kernel_fn,
        out_shape=jax.ShapeDtypeStruct((1, 1), jnp.float32),
        grid_spec=pltpu.PrefetchScalarGridSpec(
            num_scalar_prefetch=0,
            grid=(grid_n,),
            in_specs=[
                pl.BlockSpec((H, H), lambda n: (0, 0)),         # bh (resident)
                pl.BlockSpec((W, W), lambda n: (0, 0)),         # bw (resident)
                pl.BlockSpec((tb, H, W), lambda n: (n, 0, 0)),  # pred tile
                pl.BlockSpec((tb, H, W), lambda n: (n, 0, 0)),  # target tile
            ],
            out_specs=pl.BlockSpec((1, 1), lambda n: (0, 0)),
            scratch_shapes=[pltpu.VMEM((H, W), jnp.float32)] * 3,
        ),
        compiler_params=pltpu.CompilerParams(
            # The batch axis carries the running partial sums (and the
            # revisited (1,1) output block), so it is a reduction axis.
            dimension_semantics=("arbitrary",),
        ),
    )(bh, bw, pred2, target2)
    return out[0, 0]


if __name__ == "__main__":
    key = jax.random.PRNGKey(0)
    ka, kb = jax.random.split(key)
    N, C, H, W = 2, 1, 16, 16  # C=1: the module's conv kernel is (1,1,5,5)

    # pred must be in [0,1] for binary_cross_entropy (Gaussian smoothing of
    # values in [0,1] stays in [0,1] since the kernel sums to 1).
    pred = jax.nn.sigmoid(jax.random.normal(ka, (N, C, H, W), jnp.float32))
    target = (jax.random.uniform(kb, (N, C, H, W)) > 0.5).astype(jnp.float32)

    loss = soft_edge_loss(pred, target, mode='normal')
    jax.block_until_ready(loss)
    print("KERNEL_OK")
</pallas_src>

<mosaic_0001>
module attributes {stable_mosaic.version = 11 : i64} {
  func.func @_softedge_kernel(%arg0: i32, %arg1: memref<16x16xf32, #tpu.memory_space<vmem>>, %arg2: memref<16x16xf32, #tpu.memory_space<vmem>>, %arg3: memref<2x16x16xf32, #tpu.memory_space<vmem>>, %arg4: memref<2x16x16xf32, #tpu.memory_space<vmem>>, %arg5: memref<1x1xf32, #tpu.memory_space<vmem>>, %arg6: memref<16x16xf32, #tpu.memory_space<vmem>>, %arg7: memref<16x16xf32, #tpu.memory_space<vmem>>, %arg8: memref<16x16xf32, #tpu.memory_space<vmem>>) attributes {dimension_semantics = [#tpu.dimension_semantics<arbitrary>], iteration_bounds = array<i64: 1>, scalar_prefetch = 0 : i64, scratch_operands = 3 : i64, tpu.core_type = #tpu.core_type<tc>, window_params = [{pipeline_mode = #tpu.pipeline_mode<synchronous>, transform_indices = @transform_0, window_bounds = array<i64: 16, 16>}, {pipeline_mode = #tpu.pipeline_mode<synchronous>, transform_indices = @transform_1, window_bounds = array<i64: 16, 16>}, {transform_indices = @transform_2, window_bounds = array<i64: 2, 16, 16>}, {transform_indices = @transform_3, window_bounds = array<i64: 2, 16, 16>}, {pipeline_mode = #tpu.pipeline_mode<synchronous>, transform_indices = @transform_4, window_bounds = array<i64: 1, 1>}]} {
    %c0_i32 = arith.constant 0 : i32
    %0 = arith.cmpi eq, %arg0, %c0_i32 : i32
    %1 = arith.extui %0 : i1 to i32
    %c0_i32_0 = arith.constant 0 : i32
    %2 = arith.cmpi ne, %1, %c0_i32_0 : i32
    scf.if %2 {
      %cst_50 = arith.constant 0.000000e+00 : f32
      %74 = vector.broadcast %cst_50 : f32 to vector<16x16xf32>
      %c0_51 = arith.constant 0 : index
      %c0_52 = arith.constant 0 : index
      %75 = vector.load %arg6[%c0_51, %c0_52] : memref<16x16xf32, #tpu.memory_space<vmem>>, vector<16x16xf32>
      tpu.vector_store %arg6[%c0_51, %c0_52], %74 {strides = array<i32>} : memref<16x16xf32, #tpu.memory_space<vmem>>, vector<16x16xf32>,
      %cst_53 = arith.constant 0.000000e+00 : f32
      %76 = vector.broadcast %cst_53 : f32 to vector<16x16xf32>
      %c0_54 = arith.constant 0 : index
      %c0_55 = arith.constant 0 : index
      %77 = vector.load %arg7[%c0_54, %c0_55] : memref<16x16xf32, #tpu.memory_space<vmem>>, vector<16x16xf32>
      tpu.vector_store %arg7[%c0_54, %c0_55], %76 {strides = array<i32>} : memref<16x16xf32, #tpu.memory_space<vmem>>, vector<16x16xf32>,
      %cst_56 = arith.constant 0.000000e+00 : f32
      %78 = vector.broadcast %cst_56 : f32 to vector<16x16xf32>
      %c0_57 = arith.constant 0 : index
      %c0_58 = arith.constant 0 : index
      %79 = vector.load %arg8[%c0_57, %c0_58] : memref<16x16xf32, #tpu.memory_space<vmem>>, vector<16x16xf32>
      tpu.vector_store %arg8[%c0_57, %c0_58], %78 {strides = array<i32>} : memref<16x16xf32, #tpu.memory_space<vmem>>, vector<16x16xf32>,
    } else {
    }
    %c0 = arith.constant 0 : index
    %c0_1 = arith.constant 0 : index
    %c0_2 = arith.constant 0 : index
    %3 = vector.load %arg3[%c0, %c0_1, %c0_2] : memref<2x16x16xf32, #tpu.memory_space<vmem>>, vector<1x16x16xf32>
    %4 = vector.shape_cast %3 : vector<1x16x16xf32> to vector<16x16xf32>
    %c0_3 = arith.constant 0 : index
    %c0_4 = arith.constant 0 : index
    %c0_5 = arith.constant 0 : index
    %5 = vector.load %arg4[%c0_3, %c0_4, %c0_5] : memref<2x16x16xf32, #tpu.memory_space<vmem>>, vector<1x16x16xf32>
    %6 = vector.shape_cast %5 : vector<1x16x16xf32> to vector<16x16xf32>
    %c0_6 = arith.constant 0 : index
    %c0_7 = arith.constant 0 : index
    %7 = vector.load %arg2[%c0_6, %c0_7] : memref<16x16xf32, #tpu.memory_space<vmem>>, vector<16x16xf32>
    %cst = arith.constant dense<0.000000e+00> : vector<16x16xf32>
    %8 = tpu.matmul %4, %7, %cst {dimension_numbers = #tpu.dot_dimension_numbers<[1], [0], [0], [1], [0, 0, 1, 1], [], []>} : vector<16x16xf32>, vector<16x16xf32>, vector<16x16xf32> -> vector<16x16xf32>
    %c0_8 = arith.constant 0 : index
    %c0_9 = arith.constant 0 : index
    %9 = vector.load %arg1[%c0_8, %c0_9] : memref<16x16xf32, #tpu.memory_space<vmem>>, vector<16x16xf32>
    %cst_10 = arith.constant dense<0.000000e+00> : vector<16x16xf32>
    %10 = tpu.matmul %9, %8, %cst_10 {dimension_numbers = #tpu.dot_dimension_numbers<[1], [0], [0], [1], [0, 0, 1, 1], [], []>} : vector<16x16xf32>, vector<16x16xf32>, vector<16x16xf32> -> vector<16x16xf32>
    %cst_11 = arith.constant 0.000000e+00 : f32
    %cst_12 = arith.constant 1.000000e+00 : f32
    %11 = vector.broadcast %cst_11 : f32 to vector<16x16xf32>
    %12 = arith.maximumf %11, %10 : vector<16x16xf32>
    %13 = vector.broadcast %cst_12 : f32 to vector<16x16xf32>
    %14 = arith.minimumf %13, %12 : vector<16x16xf32>
    %15 = math.log %14 : vector<16x16xf32>
    %cst_13 = arith.constant -1.000000e+02 : f32
    %16 = vector.broadcast %cst_13 : f32 to vector<16x16xf32>
    %17 = arith.maximumf %15, %16 : vector<16x16xf32>
    %cst_14 = arith.constant 1.000000e+00 : f32
    %18 = vector.broadcast %cst_14 : f32 to vector<16x16xf32>
    %19 = arith.subf %18, %14 : vector<16x16xf32>
    %20 = math.log %19 : vector<16x16xf32>
    %cst_15 = arith.constant -1.000000e+02 : f32
    %21 = vector.broadcast %cst_15 : f32 to vector<16x16xf32>
    %22 = arith.maximumf %20, %21 : vector<16x16xf32>
    %23 = arith.mulf %6, %17 : vector<16x16xf32>
    %cst_16 = arith.constant 1.000000e+00 : f32
    %24 = vector.broadcast %cst_16 : f32 to vector<16x16xf32>
    %25 = arith.subf %24, %6 : vector<16x16xf32>
    %26 = arith.mulf %25, %22 : vector<16x16xf32>
    %27 = arith.addf %23, %26 : vector<16x16xf32>
    %cst_17 = arith.constant 0.000000e+00 : f32
    %28 = vector.broadcast %cst_17 : f32 to vector<16x16xf32>
    %29 = arith.subf %28, %27 : vector<16x16xf32>
    %30 = arith.mulf %6, %29 : vector<16x16xf32>
    %c1 = arith.constant 1 : index
    %c0_18 = arith.constant 0 : index
    %c0_19 = arith.constant 0 : index
    %31 = vector.load %arg3[%c1, %c0_18, %c0_19] : memref<2x16x16xf32, #tpu.memory_space<vmem>>, vector<1x16x16xf32>
    %32 = vector.shape_cast %31 : vector<1x16x16xf32> to vector<16x16xf32>
    %c1_20 = arith.constant 1 : index
    %c0_21 = arith.constant 0 : index
    %c0_22 = arith.constant 0 : index
    %33 = vector.load %arg4[%c1_20, %c0_21, %c0_22] : memref<2x16x16xf32, #tpu.memory_space<vmem>>, vector<1x16x16xf32>
    %34 = vector.shape_cast %33 : vector<1x16x16xf32> to vector<16x16xf32>
    %c0_23 = arith.constant 0 : index
    %c0_24 = arith.constant 0 : index
    %35 = vector.load %arg2[%c0_23, %c0_24] : memref<16x16xf32, #tpu.memory_space<vmem>>, vector<16x16xf32>
    %cst_25 = arith.constant dense<0.000000e+00> : vector<16x16xf32>
    %36 = tpu.matmul %32, %35, %cst_25 {dimension_numbers = #tpu.dot_dimension_numbers<[1], [0], [0], [1], [0, 0, 1, 1], [], []>} : vector<16x16xf32>, vector<16x16xf32>, vector<16x16xf32> -> vector<16x16xf32>
    %c0_26 = arith.constant 0 : index
    %c0_27 = arith.constant 0 : index
    %37 = vector.load %arg1[%c0_26, %c0_27] : memref<16x16xf32, #tpu.memory_space<vmem>>, vector<16x16xf32>
    %cst_28 = arith.constant dense<0.000000e+00> : vector<16x16xf32>
    %38 = tpu.matmul %37, %36, %cst_28 {dimension_numbers = #tpu.dot_dimension_numbers<[1], [0], [0], [1], [0, 0, 1, 1], [], []>} : vector<16x16xf32>, vector<16x16xf32>, vector<16x16xf32> -> vector<16x16xf32>
    %cst_29 = arith.constant 0.000000e+00 : f32
    %cst_30 = arith.constant 1.000000e+00 : f32
    %39 = vector.broadcast %cst_29 : f32 to vector<16x16xf32>
    %40 = arith.maximumf %39, %38 : vector<16x16xf32>
    %41 = vector.broadcast %cst_30 : f32 to vector<16x16xf32>
    %42 = arith.minimumf %41, %40 : vector<16x16xf32>
    %43 = math.log %42 : vector<16x16xf32>
    %cst_31 = arith.constant -1.000000e+02 : f32
    %44 = vector.broadcast %cst_31 : f32 to vector<16x16xf32>
    %45 = arith.maximumf %43, %44 : vector<16x16xf32>
    %cst_32 = arith.constant 1.000000e+00 : f32
    %46 = vector.broadcast %cst_32 : f32 to vector<16x16xf32>
    %47 = arith.subf %46, %42 : vector<16x16xf32>
    %48 = math.log %47 : vector<16x16xf32>
    %cst_33 = arith.constant -1.000000e+02 : f32
    %49 = vector.broadcast %cst_33 : f32 to vector<16x16xf32>
    %50 = arith.maximumf %48, %49 : vector<16x16xf32>
    %51 = arith.mulf %34, %45 : vector<16x16xf32>
    %cst_34 = arith.constant 1.000000e+00 : f32
    %52 = vector.broadcast %cst_34 : f32 to vector<16x16xf32>
    %53 = arith.subf %52, %34 : vector<16x16xf32>
    %54 = arith.mulf %53, %50 : vector<16x16xf32>
    %55 = arith.addf %51, %54 : vector<16x16xf32>
    %cst_35 = arith.constant 0.000000e+00 : f32
    %56 = vector.broadcast %cst_35 : f32 to vector<16x16xf32>
    %57 = arith.subf %56, %55 : vector<16x16xf32>
    %58 = arith.mulf %34, %57 : vector<16x16xf32>
    %59 = arith.addf %6, %34 : vector<16x16xf32>
    %60 = arith.addf %29, %57 : vector<16x16xf32>
    %61 = arith.addf %30, %58 : vector<16x16xf32>
    %c0_36 = arith.constant 0 : index
    %c0_37 = arith.constant 0 : index
    %62 = vector.load %arg6[%c0_36, %c0_37] : memref<16x16xf32, #tpu.memory_space<vmem>>, vector<16x16xf32>
    %63 = arith.addf %62, %59 : vector<16x16xf32>
    %c0_38 = arith.constant 0 : index
    %c0_39 = arith.constant 0 : index
    %64 = vector.load %arg6[%c0_38, %c0_39] : memref<16x16xf32, #tpu.memory_space<vmem>>, vector<16x16xf32>
    tpu.vector_store %arg6[%c0_38, %c0_39], %63 {strides = array<i32>} : memref<16x16xf32, #tpu.memory_space<vmem>>, vector<16x16xf32>,
    %c0_40 = arith.constant 0 : index
    %c0_41 = arith.constant 0 : index
    %65 = vector.load %arg7[%c0_40, %c0_41] : memref<16x16xf32, #tpu.memory_space<vmem>>, vector<16x16xf32>
    %66 = arith.addf %65, %60 : vector<16x16xf32>
    %c0_42 = arith.constant 0 : index
    %c0_43 = arith.constant 0 : index
    %67 = vector.load %arg7[%c0_42, %c0_43] : memref<16x16xf32, #tpu.memory_space<vmem>>, vector<16x16xf32>
    tpu.vector_store %arg7[%c0_42, %c0_43], %66 {strides = array<i32>} : memref<16x16xf32, #tpu.memory_space<vmem>>, vector<16x16xf32>,
    %c0_44 = arith.constant 0 : index
    %c0_45 = arith.constant 0 : index
    %68 = vector.load %arg8[%c0_44, %c0_45] : memref<16x16xf32, #tpu.memory_space<vmem>>, vector<16x16xf32>
    %69 = arith.addf %68, %61 : vector<16x16xf32>
    %c0_46 = arith.constant 0 : index
    %c0_47 = arith.constant 0 : index
    %70 = vector.load %arg8[%c0_46, %c0_47] : memref<16x16xf32, #tpu.memory_space<vmem>>, vector<16x16xf32>
    tpu.vector_store %arg8[%c0_46, %c0_47], %69 {strides = array<i32>} : memref<16x16xf32, #tpu.memory_space<vmem>>, vector<16x16xf32>,
    %c0_i32_48 = arith.constant 0 : i32
    %71 = arith.cmpi eq, %arg0, %c0_i32_48 : i32
    %72 = arith.extui %71 : i1 to i32
    %c0_i32_49 = arith.constant 0 : i32
    %73 = arith.cmpi ne, %72, %c0_i32_49 : i32
    scf.if %73 {
      %c0_50 = arith.constant 0 : index
      %c0_51 = arith.constant 0 : index
      %74 = vector.load %arg6[%c0_50, %c0_51] : memref<16x16xf32, #tpu.memory_space<vmem>>, vector<16x16xf32>
      %75 = vector.shape_cast %74 : vector<16x16xf32> to vector<1x16x16xf32>
      %cst_52 = arith.constant dense<0.000000e+00> : vector<1xf32>
      %76 = vector.multi_reduction <add>, %75, %cst_52 [1, 2] : vector<1x16x16xf32> to vector<1xf32>
      %77 = vector.shape_cast %76 : vector<1xf32> to vector<1x1x1xf32>
      %78 = vector.extract %77[0, 0, 0] : f32 from vector<1x1x1xf32>
      %c0_53 = arith.constant 0 : index
      %c0_54 = arith.constant 0 : index
      %79 = vector.load %arg7[%c0_53, %c0_54] : memref<16x16xf32, #tpu.memory_space<vmem>>, vector<16x16xf32>
      %80 = vector.shape_cast %79 : vector<16x16xf32> to vector<1x16x16xf32>
      %cst_55 = arith.constant dense<0.000000e+00> : vector<1xf32>
      %81 = vector.multi_reduction <add>, %80, %cst_55 [1, 2] : vector<1x16x16xf32> to vector<1xf32>
      %82 = vector.shape_cast %81 : vector<1xf32> to vector<1x1x1xf32>
      %83 = vector.extract %82[0, 0, 0] : f32 from vector<1x1x1xf32>
      %c0_56 = arith.constant 0 : index
      %c0_57 = arith.constant 0 : index
      %84 = vector.load %arg8[%c0_56, %c0_57] : memref<16x16xf32, #tpu.memory_space<vmem>>, vector<16x16xf32>
      %85 = vector.shape_cast %84 : vector<16x16xf32> to vector<1x16x16xf32>
      %cst_58 = arith.constant dense<0.000000e+00> : vector<1xf32>
      %86 = vector.multi_reduction <add>, %85, %cst_58 [1, 2] : vector<1x16x16xf32> to vector<1xf32>
      %87 = vector.shape_cast %86 : vector<1xf32> to vector<1x1x1xf32>
      %88 = vector.extract %87[0, 0, 0] : f32 from vector<1x1x1xf32>
      %cst_59 = arith.constant 5.120000e+02 : f32
      %89 = arith.divf %78, %cst_59 : f32
      %cst_60 = arith.constant 1.000000e+00 : f32
      %90 = arith.subf %cst_60, %89 : f32
      %cst_61 = arith.constant 1.000000e+00 : f32
      %91 = arith.subf %cst_61, %90 : f32
      %92 = arith.mulf %91, %83 : f32
      %cst_62 = arith.constant 2.000000e+00 : f32
      %93 = arith.mulf %cst_62, %90 : f32
      %cst_63 = arith.constant 1.000000e+00 : f32
      %94 = arith.subf %93, %cst_63 : f32
      %95 = arith.mulf %94, %88 : f32
      %96 = arith.addf %92, %95 : f32
      %cst_64 = arith.constant 5.120000e+02 : f32
      %97 = arith.divf %96, %cst_64 : f32
      %98 = vector.broadcast %97 : f32 to vector<1x1xf32>
      %c0_65 = arith.constant 0 : index
      %c0_66 = arith.constant 0 : index
      %99 = vector.load %arg5[%c0_65, %c0_66] : memref<1x1xf32, #tpu.memory_space<vmem>>, vector<1x1xf32>
      tpu.vector_store %arg5[%c0_65, %c0_66], %98 {strides = array<i32>} : memref<1x1xf32, #tpu.memory_space<vmem>>, vector<1x1xf32>,
    } else {
    }
    return
  }
  func.func @transform_0(%arg0: i32) -> (i32, i32) {
    %c0_i32 = arith.constant 0 : i32
    %c0_i32_0 = arith.constant 0 : i32
    %c0_i32_1 = arith.constant 0 : i32
    return %c0_i32, %c0_i32_0 : i32, i32
  }
  func.func @transform_1(%arg0: i32) -> (i32, i32) {
    %c0_i32 = arith.constant 0 : i32
    %c0_i32_0 = arith.constant 0 : i32
    %c0_i32_1 = arith.constant 0 : i32
    return %c0_i32, %c0_i32_0 : i32, i32
  }
  func.func @transform_2(%arg0: i32) -> (i32, i32, i32) {
    %c0_i32 = arith.constant 0 : i32
    %c0_i32_0 = arith.constant 0 : i32
    %c0_i32_1 = arith.constant 0 : i32
    return %arg0, %c0_i32, %c0_i32_0 : i32, i32, i32
  }
  func.func @transform_3(%arg0: i32) -> (i32, i32, i32) {
    %c0_i32 = arith.constant 0 : i32
    %c0_i32_0 = arith.constant 0 : i32
    %c0_i32_1 = arith.constant 0 : i32
    return %arg0, %c0_i32, %c0_i32_0 : i32, i32, i32
  }
  func.func @transform_4(%arg0: i32) -> (i32, i32) {
    %c0_i32 = arith.constant 0 : i32
    %c0_i32_0 = arith.constant 0 : i32
    %c0_i32_1 = arith.constant 0 : i32
    return %c0_i32, %c0_i32_0 : i32, i32
  }
}

</mosaic_0001>

<llo_original>
// kernel: tpu_custom_call.1
$region0: #{tpu_custom_call.1}
  #allocation0 [shape = 'u32[]', space=smem, size = 0x4, offset = 0x4, fixed_abs, tag = 'smem constant byte address 0x4 - core index']
  #allocation1 [shape = 'u32[72,128]{1,0:T(1,128)}', space=vmem, size = 0x9000, scoped, tag = 'internal scratch']
  #allocation2 [shape = 'f32[16,16]{1,0:T(8,128)}', space=vmem, size = 0x2000, scoped, tag = 'scratch operand']
  #allocation3 [shape = 'f32[16,16]{1,0:T(8,128)}', space=vmem, size = 0x2000, scoped, tag = 'scratch operand']
  #allocation4 [shape = 'f32[16,16]{1,0:T(8,128)}', space=vmem, size = 0x2000, scoped, tag = 'scratch operand']
  %s0 = inlined_call_operand.hbm [shape: f32[16,16], index: 0, kind: input, shape index: {}]
  %s1 = inlined_call_operand.hbm [shape: f32[16,16], index: 1, kind: input, shape index: {}]
  %s2 = inlined_call_operand.hbm [shape: f32[2,16,16], index: 2, kind: input, shape index: {}]
  %s3 = inlined_call_operand.hbm [shape: f32[2,16,16], index: 3, kind: input, shape index: {}]
  %s4 = inlined_call_operand.hbm [shape: f32[1,1], index: 4, kind: output, shape index: {}]
  %s5 = sld [smem:[#allocation0]]
  $region50: #{tpu_custom_call.1} parent=0
    _
  %s7 = ssub.s32 1, %s5
  %s8 = scalar_select 0, %s7, %s5
  $region1: #{tpu_custom_call.1} parent=0
    #allocation5 [shape = 'u8[8192]{0}', space=vmem, size = 0x2000, scoped, tag = 'input window, operand 0, single buffered']
    #allocation6 [shape = 's32[1]{0}', space=sflag, size = 0x4, scoped, tag = 'scoped memory for tpu_custom_call.1']
    #allocation7 [shape = 's32[1]{0}', space=sflag, size = 0x4, scoped, tag = 'scoped memory for tpu_custom_call.1']
    #allocation8 [shape = 'u8[8192]{0}', space=vmem, size = 0x2000, scoped, tag = 'input window, operand 1, single buffered']
    #allocation9 [shape = 's32[1]{0}', space=sflag, size = 0x4, scoped, tag = 'scoped memory for tpu_custom_call.1']
    #allocation10 [shape = 'u8[16384]{0}', space=vmem, size = 0x4000, scoped, tag = 'input window, operand 2, single buffered']
    #allocation11 [shape = 'u8[16384]{0}', space=vmem, size = 0x4000, scoped, tag = 'input window, operand 3, single buffered']
    #allocation12 [shape = 's32[1]{0}', space=sflag, size = 0x4, scoped, tag = 'scoped memory for tpu_custom_call.1']
    #allocation13 [shape = 'u8[512]{0}', space=vmem, size = 0x400, scoped, tag = 'output window, operand 0, single buffered']
    %9 = vsyncpa [#allocation6], 0
    %10 = vsyncpa [#allocation9], 0
    %11 = vsyncpa [#allocation12], 0
    %12 = vsyncpa [#allocation7], 0
    // Predicated region
    $region2: #{tpu_custom_call.1} parent=1 // pred_check
      _
    $region3: #{tpu_custom_call.1} parent=1 // pred_check_branch
      %14 = sbr.rel (0) target = $region5
    $region4: #{tpu_custom_call.1} parent=1 // pred_region
      %16 = vsyncadd [#allocation6], 0
      %s17 = sshll.u32 %s0, 4
      %s18 = int_to_ptr.hbm [resolvable:$true] %s17
      %s19 = sshll.u32 [#allocation5], 4
      %s20 = int_to_ptr.vmem [resolvable:$true] %s19
      %25 = dma.hbm_to_vmem [thread:$0]  %s18, 256, %s20, [#allocation6], 128, 128, 8
    $region5: #{tpu_custom_call.1} parent=1 // pred_fallthru
      _
    // Predicated region
    $region6: #{tpu_custom_call.1} parent=1 // pred_check
      _
    $region7: #{tpu_custom_call.1} parent=1 // pred_check_branch
      %27 = sbr.rel (0) target = $region9
    $region8: #{tpu_custom_call.1} parent=1 // pred_region
      %29 = vsyncadd [#allocation9], 0
      %s30 = sshll.u32 %s1, 4
      %s31 = int_to_ptr.hbm [resolvable:$true] %s30
      %s32 = sshll.u32 [#allocation8], 4
      %s33 = int_to_ptr.vmem [resolvable:$true] %s32
      %38 = dma.hbm_to_vmem [thread:$0]  %s31, 256, %s33, [#allocation9], 128, 128, 8
    $region9: #{tpu_custom_call.1} parent=1 // pred_fallthru
      _
    // Predicated region
    $region10: #{tpu_custom_call.1} parent=1 // pred_check
      _
    $region11: #{tpu_custom_call.1} parent=1 // pred_check_branch
      %40 = sbr.rel (0) target = $region13
    $region12: #{tpu_custom_call.1} parent=1 // pred_region
      %42 = vsyncadd [#allocation9], 0
      %s43 = sshll.u32 %s2, 4
      %s44 = int_to_ptr.hbm [resolvable:$true] %s43
      %s45 = sshll.u32 [#allocation10], 4
      %s46 = int_to_ptr.vmem [resolvable:$true] %s45
      %51 = dma.hbm_to_vmem [thread:$0]  %s44, 512, %s46, [#allocation9], 128, 128, 8
    $region13: #{tpu_custom_call.1} parent=1 // pred_fallthru
      _
    // Predicated region
    $region14: #{tpu_custom_call.1} parent=1 // pred_check
      _
    $region15: #{tpu_custom_call.1} parent=1 // pred_check_branch
      %53 = sbr.rel (0) target = $region17
    $region16: #{tpu_custom_call.1} parent=1 // pred_region
      %55 = vsyncadd [#allocation12], 0
      %s56 = sshll.u32 %s3, 4
      %s57 = int_to_ptr.hbm [resolvable:$true] %s56
      %s58 = sshll.u32 [#allocation11], 4
      %s59 = int_to_ptr.vmem [resolvable:$true] %s58
      %64 = dma.hbm_to_vmem [thread:$0]  %s57, 512, %s59, [#allocation12], 128, 128, 8
    $region17: #{tpu_custom_call.1} parent=1 // pred_fallthru
      _
    // Predicated region
    $region18: #{tpu_custom_call.1} parent=1 // pred_check
      _
    $region19: #{tpu_custom_call.1} parent=1 // pred_check_branch
      %66 = sbr.rel (0) target = $region21
    $region20: #{tpu_custom_call.1} parent=1 // pred_region
      %68 = dma.done [#allocation6], 256
    $region21: #{tpu_custom_call.1} parent=1 // pred_fallthru
      _
    // Predicated region
    $region22: #{tpu_custom_call.1} parent=1 // pred_check
      _
    $region23: #{tpu_custom_call.1} parent=1 // pred_check_branch
      %70 = sbr.rel (0) target = $region25
    $region24: #{tpu_custom_call.1} parent=1 // pred_region
      %72 = dma.done [#allocation9], 256
    $region25: #{tpu_custom_call.1} parent=1 // pred_fallthru
      _
    // Predicated region
    $region26: #{tpu_custom_call.1} parent=1 // pred_check
      _
    $region27: #{tpu_custom_call.1} parent=1 // pred_check_branch
      %74 = sbr.rel (0) target = $region29
    $region28: #{tpu_custom_call.1} parent=1 // pred_region
      %76 = dma.done [#allocation9], 512
    $region29: #{tpu_custom_call.1} parent=1 // pred_fallthru
      _
    // Predicated region
    $region30: #{tpu_custom_call.1} parent=1 // pred_check
      _
    $region31: #{tpu_custom_call.1} parent=1 // pred_check_branch
      %78 = sbr.rel (0) target = $region33
    $region32: #{tpu_custom_call.1} parent=1 // pred_region
      %80 = dma.done [#allocation12], 512
    $region33: #{tpu_custom_call.1} parent=1 // pred_fallthru
      _
    %p81 = scmp.eq.s32.totalorder 0, 0
    // Predicated region
    $region34: #{tpu_custom_call.1} parent=1 // pred_check
      %p82 = pneg %p81
    $region35: #{tpu_custom_call.1} parent=1 // pred_check_branch
      %84 = sbr.rel (%p82) target = $region37
    $region36: #{tpu_custom_call.1} parent=1 // pred_region
      %vm85 = vcmask 130048
      %86 = vst.msk [vmem:[#allocation2] sm:$0xff] %vm85, 0.0
      %87 = vst.msk [vmem:[#allocation2 + $0x8] sm:$0xff] %vm85, 0.0
      %88 = vst.msk [vmem:[#allocation3] sm:$0xff] %vm85, 0.0
      %89 = vst.msk [vmem:[#allocation3 + $0x8] sm:$0xff] %vm85, 0.0
      %90 = vst.msk [vmem:[#allocation4] sm:$0xff] %vm85, 0.0
      %91 = vst.msk [vmem:[#allocation4 + $0x8] sm:$0xff] %vm85, 0.0
    $region37: #{tpu_custom_call.1} parent=1 // pred_fallthru
      _
    %v92 = vld [vmem:[#allocation10] sm:$0xff]
    %v93 = vld [vmem:[#allocation10 + $0x8] sm:$0xff]
    %v94 = vld [vmem:[#allocation11] sm:$0xff]
    %v95 = vld [vmem:[#allocation11 + $0x8] sm:$0xff]
    %v96 = vld [vmem:[#allocation8] sm:$0xff]
    %v97 = vld [vmem:[#allocation8 + $0x8] sm:$0xff]
    %vm98 = vcmask 130048
    %v100 = vsel %vm98, %v92, 0
    %v103 = vsel %vm98, %v93, 0
    %105 = vmatpush.msra.mxu0 0.0
    %106 = vmatpush.msra.mxu0 0.0
    %107 = vmatpush.msra.mxu0 0.0
    %108 = vmatpush.msra.mxu0 0.0
    %109 = vmatpush.msra.mxu0 0.0
    %110 = vmatpush.msra.mxu0 0.0
    %111 = vmatpush.msra.mxu0 0.0
    %112 = vmatpush.msra.mxu0 0.0
    %113 = vmatpush.msra.mxu0 0.0
    %114 = vmatpush.msra.mxu0 0.0
    %115 = vmatpush.msra.mxu0 0.0
    %116 = vmatpush.msra.mxu0 0.0
    %117 = vmatpush.msra.mxu0 0.0
    %118 = vmatpush.msra.mxu0 0.0
    %119 = vmatpush.msra.mxu0 %v97
    %120 = vmatpush.msra.mxu0 %v96
    %121 = vmatmul.f32.gmra.mxu0 %v100
    %v122 = vpop.f32.mrf.mxu0
    %v123 = vadd.f32 0.0, %v122
    %124 = vmatmul.f32.gmra.mxu0 %v103
    %v125 = vpop.f32.mrf.mxu0
    %v126 = vadd.f32 0.0, %v125
    %127 = vdwg.mxu0
    %v128 = vld [vmem:[#allocation5] sm:$0xff]
    %v129 = vld [vmem:[#allocation5 + $0x8] sm:$0xff]
    %v131 = vsel %vm98, %v128, 0
    %v134 = vsel %vm98, %v129, 0
    %136 = vmatpush.msra.mxu0 0.0
    %137 = vmatpush.msra.mxu0 0.0
    %138 = vmatpush.msra.mxu0 0.0
    %139 = vmatpush.msra.mxu0 0.0
    %140 = vmatpush.msra.mxu0 0.0
    %141 = vmatpush.msra.mxu0 0.0
    %142 = vmatpush.msra.mxu0 0.0
    %143 = vmatpush.msra.mxu0 0.0
    %144 = vmatpush.msra.mxu0 0.0
    %145 = vmatpush.msra.mxu0 0.0
    %146 = vmatpush.msra.mxu0 0.0
    %147 = vmatpush.msra.mxu0 0.0
    %148 = vmatpush.msra.mxu0 0.0
    %149 = vmatpush.msra.mxu0 0.0
    %150 = vmatpush.msra.mxu0 %v126
    %151 = vmatpush.msra.mxu0 %v123
    %152 = vmatmul.f32.gmra.mxu0 %v131
    %v153 = vpop.f32.mrf.mxu0
    %v154 = vadd.f32 0.0, %v153
    %155 = vmatmul.f32.gmra.mxu0 %v134
    %v156 = vpop.f32.mrf.mxu0
    %v157 = vadd.f32 0.0, %v156
    %158 = vdwg.mxu0
    %v159 = vmax.f32 %v154, 0.0
    %v160 = vmax.f32 %v157, 0.0
    %v161 = vmin.f32 %v159, 1.0
    %v162 = vmin.f32 %v160, 1.0
    %v163 = vlog2.pop %v161
    %v164 = vmul.f32 %v163, 0.6931472
    %v165 = vlog2.pop %v162
    %v166 = vmul.f32 %v165, 0.6931472
    %v167 = vmax.f32 %v164, -100.0
    %v168 = vmax.f32 %v166, -100.0
    %v169 = vsub.f32 1.0, %v161
    %v170 = vsub.f32 1.0, %v162
    %v171 = vlog2.pop %v169
    %v172 = vmul.f32 %v171, 0.6931472
    %v173 = vlog2.pop %v170
    %v174 = vmul.f32 %v173, 0.6931472
    %v175 = vmax.f32 %v172, -100.0
    %v176 = vmax.f32 %v174, -100.0
    %v177 = vmul.f32 %v94, %v167
    %v178 = vmul.f32 %v95, %v168
    %v179 = vsub.f32 1.0, %v94
    %v180 = vsub.f32 1.0, %v95
    %v181 = vmul.f32 %v179, %v175
    %v182 = vmul.f32 %v180, %v176
    %v183 = vadd.f32 %v177, %v181
    %v184 = vadd.f32 %v178, %v182
    %v185 = vsub.f32 0.0, %v183
    %v186 = vsub.f32 0.0, %v184
    %v187 = vmul.f32 %v94, %v185
    %v188 = vmul.f32 %v95, %v186
    %s189 = scalar_lea.vmem [#allocation10], 16
    %v190 = vld [vmem:[%s189] sm:$0xff]
    %v191 = vld [vmem:[%s189 + $0x8] sm:$0xff]
    %s192 = scalar_lea.vmem [#allocation11], 16
    %v193 = vld [vmem:[%s192] sm:$0xff]
    %v194 = vld [vmem:[%s192 + $0x8] sm:$0xff]
    %v196 = vsel %vm98, %v190, 0
    %v199 = vsel %vm98, %v191, 0
    %201 = vmatpush.msra.mxu0 0.0
    %202 = vmatpush.msra.mxu0 0.0
    %203 = vmatpush.msra.mxu0 0.0
    %204 = vmatpush.msra.mxu0 0.0
    %205 = vmatpush.msra.mxu0 0.0
    %206 = vmatpush.msra.mxu0 0.0
    %207 = vmatpush.msra.mxu0 0.0
    %208 = vmatpush.msra.mxu0 0.0
    %209 = vmatpush.msra.mxu0 0.0
    %210 = vmatpush.msra.mxu0 0.0
    %211 = vmatpush.msra.mxu0 0.0
    %212 = vmatpush.msra.mxu0 0.0
    %213 = vmatpush.msra.mxu0 0.0
    %214 = vmatpush.msra.mxu0 0.0
    %215 = vmatpush.msra.mxu0 %v97
    %216 = vmatpush.msra.mxu0 %v96
    %217 = vmatmul.f32.gmra.mxu0 %v196
    %v218 = vpop.f32.mrf.mxu0
    %v219 = vadd.f32 0.0, %v218
    %220 = vmatmul.f32.gmra.mxu0 %v199
    %v221 = vpop.f32.mrf.mxu0
    %v222 = vadd.f32 0.0, %v221
    %223 = vdwg.mxu0
    %224 = vmatpush.msra.mxu0 0.0
    %225 = vmatpush.msra.mxu0 0.0
    %226 = vmatpush.msra.mxu0 0.0
    %227 = vmatpush.msra.mxu0 0.0
    %228 = vmatpush.msra.mxu0 0.0
    %229 = vmatpush.msra.mxu0 0.0
    %230 = vmatpush.msra.mxu0 0.0
    %231 = vmatpush.msra.mxu0 0.0
    %232 = vmatpush.msra.mxu0 0.0
    %233 = vmatpush.msra.mxu0 0.0
    %234 = vmatpush.msra.mxu0 0.0
    %235 = vmatpush.msra.mxu0 0.0
    %236 = vmatpush.msra.mxu0 0.0
    %237 = vmatpush.msra.mxu0 0.0
    %238 = vmatpush.msra.mxu0 %v222
    %239 = vmatpush.msra.mxu0 %v219
    %240 = vmatmul.f32.gmra.mxu0 %v131
    %v241 = vpop.f32.mrf.mxu0
    %v242 = vadd.f32 0.0, %v241
    %243 = vmatmul.f32.gmra.mxu0 %v134
    %v244 = vpop.f32.mrf.mxu0
    %v245 = vadd.f32 0.0, %v244
    %246 = vdwg.mxu0
    %v247 = vmax.f32 %v242, 0.0
    %v248 = vmax.f32 %v245, 0.0
    %v249 = vmin.f32 %v247, 1.0
    %v250 = vmin.f32 %v248, 1.0
    %v251 = vlog2.pop %v249
    %v252 = vmul.f32 %v251, 0.6931472
    %v253 = vlog2.pop %v250
    %v254 = vmul.f32 %v253, 0.6931472
    %v255 = vmax.f32 %v252, -100.0
    %v256 = vmax.f32 %v254, -100.0
    %v257 = vsub.f32 1.0, %v249
    %v258 = vsub.f32 1.0, %v250
    %v259 = vlog2.pop %v257
    %v260 = vmul.f32 %v259, 0.6931472
    %v261 = vlog2.pop %v258
    %v262 = vmul.f32 %v261, 0.6931472
    %v263 = vmax.f32 %v260, -100.0
    %v264 = vmax.f32 %v262, -100.0
    %v265 = vmul.f32 %v193, %v255
    %v266 = vmul.f32 %v194, %v256
    %v267 = vsub.f32 1.0, %v193
    %v268 = vsub.f32 1.0, %v194
    %v269 = vmul.f32 %v267, %v263
    %v270 = vmul.f32 %v268, %v264
    %v271 = vadd.f32 %v265, %v269
    %v272 = vadd.f32 %v266, %v270
    %v273 = vsub.f32 0.0, %v271
    %v274 = vsub.f32 0.0, %v272
    %v275 = vmul.f32 %v193, %v273
    %v276 = vmul.f32 %v194, %v274
    %v277 = vadd.f32 %v94, %v193
    %v278 = vadd.f32 %v95, %v194
    %v279 = vadd.f32 %v185, %v273
    %v280 = vadd.f32 %v186, %v274
    %v281 = vadd.f32 %v187, %v275
    %v282 = vadd.f32 %v188, %v276
    %v283 = vld [vmem:[#allocation2] sm:$0xff]
    %v284 = vld [vmem:[#allocation2 + $0x8] sm:$0xff]
    %v285 = vadd.f32 %v283, %v277
    %v286 = vadd.f32 %v284, %v278
    %287 = vst.msk [vmem:[#allocation2] sm:$0xff] %vm98, %v285
    %288 = vst.msk [vmem:[#allocation2 + $0x8] sm:$0xff] %vm98, %v286
    %v289 = vld [vmem:[#allocation3] sm:$0xff]
    %v290 = vld [vmem:[#allocation3 + $0x8] sm:$0xff]
    %v291 = vadd.f32 %v289, %v279
    %v292 = vadd.f32 %v290, %v280
    %293 = vst.msk [vmem:[#allocation3] sm:$0xff] %vm98, %v291
    %294 = vst.msk [vmem:[#allocation3 + $0x8] sm:$0xff] %vm98, %v292
    %v295 = vld [vmem:[#allocation4] sm:$0xff]
    %v296 = vld [vmem:[#allocation4 + $0x8] sm:$0xff]
    %v297 = vadd.f32 %v295, %v281
    %v298 = vadd.f32 %v296, %v282
    %299 = vst.msk [vmem:[#allocation4] sm:$0xff] %vm98, %v297
    %300 = vst.msk [vmem:[#allocation4 + $0x8] sm:$0xff] %vm98, %v298
    // Predicated region
    $region38: #{tpu_custom_call.1} parent=1 // pred_check
      %p301 = pneg %p81
    $region39: #{tpu_custom_call.1} parent=1 // pred_check_branch
      %303 = sbr.rel (%p301) target = $region41
    $region40: #{tpu_custom_call.1} parent=1 // pred_region
      %v304 = vld [vmem:[#allocation2] sm:$0xff]
      %v305 = vld [vmem:[#allocation2 + $0x8] sm:$0xff]
      %v306 = vsel %vm98, %v304, 0.0
      %v307 = vsel %vm98, %v305, 0.0
      %v308 = vadd.f32 %v306, %v307
      %309 = vadd.xlane.f32.xlu0 %v308
      %v310 = vpop.xlane.xlu0 %309
      %v311 = vrot.slane %v310, 4
      %v312 = vadd.f32 %v310, %v311
      %v313 = vrot.slane %v312, 2
      %v314 = vadd.f32 %v312, %v313
      %v315 = vrot.slane %v314, 1
      %v316 = vadd.f32 %v314, %v315
      %s317 = vtos %v316
      %v318 = vld [vmem:[#allocation3] sm:$0xff]
      %v319 = vld [vmem:[#allocation3 + $0x8] sm:$0xff]
      %v320 = vsel %vm98, %v318, 0.0
      %v321 = vsel %vm98, %v319, 0.0
      %v322 = vadd.f32 %v320, %v321
      %323 = vadd.xlane.f32.xlu0 %v322
      %v324 = vpop.xlane.xlu0 %323
      %v325 = vrot.slane %v324, 4
      %v326 = vadd.f32 %v324, %v325
      %v327 = vrot.slane %v326, 2
      %v328 = vadd.f32 %v326, %v327
      %v329 = vrot.slane %v328, 1
      %v330 = vadd.f32 %v328, %v329
      %s331 = vtos %v330
      %v332 = vld [vmem:[#allocation4] sm:$0xff]
      %v333 = vld [vmem:[#allocation4 + $0x8] sm:$0xff]
      %v334 = vsel %vm98, %v332, 0.0
      %v335 = vsel %vm98, %v333, 0.0
      %v336 = vadd.f32 %v334, %v335
      %337 = vadd.xlane.f32.xlu0 %v336
      %v338 = vpop.xlane.xlu0 %337
      %v339 = vrot.slane %v338, 4
      %v340 = vadd.f32 %v338, %v339
      %v341 = vrot.slane %v340, 2
      %v342 = vadd.f32 %v340, %v341
      %v343 = vrot.slane %v342, 1
      %v344 = vadd.f32 %v342, %v343
      %s345 = vtos %v344
      %v346 = vrcp.pop 512.0
      %v347 = vmul.f32 512.0, %v346
      %v348 = vsub.f32 1.0, %v347
      %v349 = vmul.f32 %v346, %v348
      %v350 = vadd.f32 %v346, %v349
      %vm351 = vweird.f32 %v346
      %v352 = vsel %vm351, %v346, %v350
      %s353 = vtos %v352
      %s354 = smul.f32 %s317, %s353
      %s355 = ssub.f32 1.0, %s354
      %s356 = ssub.f32 1.0, %s355
      %s357 = smul.f32 %s356, %s331
      %s358 = smul.f32 %s355, 2.0
      %s359 = ssub.f32 %s358, 1.0
      %s360 = smul.f32 %s359, %s345
      %s361 = sadd.f32 %s357, %s360
      %v362 = vrcp.pop 512.0
      %v363 = vmul.f32 512.0, %v362
      %v364 = vsub.f32 1.0, %v363
      %v365 = vmul.f32 %v362, %v364
      %v366 = vadd.f32 %v362, %v365
      %vm367 = vweird.f32 %v362
      %v368 = vsel %vm367, %v362, %v366
      %s369 = vtos %v368
      %s370 = smul.f32 %s361, %s369
      %v371 = vstv %s370
      %vm372 = vcmask 0
      %373 = vst.msk [vmem:[#allocation13] sm:$0x1] %vm372, %v371
    $region41: #{tpu_custom_call.1} parent=1 // pred_fallthru
      _
    // Predicated region
    $region42: #{tpu_custom_call.1} parent=1 // pred_check
      _
    $region43: #{tpu_custom_call.1} parent=1 // pred_check_branch
      %375 = sbr.rel (0) target = $region45
    $region44: #{tpu_custom_call.1} parent=1 // pred_region
      %377 = vsyncadd [#allocation7], 0
      %s379 = sshll.u32 [#allocation13], 4
      %s380 = int_to_ptr.vmem [resolvable:$true] %s379
      %s381 = sshll.u32 %s4, 4
      %s382 = int_to_ptr.hbm [resolvable:$true] %s381
      %384 = dma.vmem_to_hbm [thread:$0]  %s380, 16, %s382, [#allocation7]
    $region45: #{tpu_custom_call.1} parent=1 // pred_fallthru
      _
    // Predicated region
    $region46: #{tpu_custom_call.1} parent=1 // pred_check
      _
    $region47: #{tpu_custom_call.1} parent=1 // pred_check_branch
      %386 = sbr.rel (0) target = $region49
    $region48: #{tpu_custom_call.1} parent=1 // pred_region
      %388 = dma.done [#allocation7], 16
    $region49: #{tpu_custom_call.1} parent=1 // pred_fallthru
      _
    %389 = vsyncpa [#allocation6], 1
    %390 = vsyncpa [#allocation9], 1
    %391 = vsyncpa [#allocation12], 1
    %392 = vsyncpa [#allocation7], 1

</llo_original>
